<compile_context>
chip_gen: v6e
topology: v6e:2x2x1
jax: 0.10.0
libtpu: 0.0.40
codegen_flags: <defaults>
</compile_context>

<pallas_src>
import functools

import jax
import jax.numpy as jnp
from jax import lax
from jax.experimental import pallas as pl
from jax.experimental.pallas import tpu as pltpu


# ---------------------------------------------------------------------------
# Per-generation VMEM budgets
# ---------------------------------------------------------------------------

@functools.lru_cache(maxsize=None)
def _vmem_capacity_bytes():
    try:
        return int(getattr(pltpu.get_tpu_info(), "vmem_capacity_bytes", 128 << 20))
    except Exception:                                   # interpret mode / CPU
        return 128 << 20


def _vmem_budget():
    # Double-buffered working-set budget: <= 1/4 of physical VMEM, capped at
    # 32 MiB (v5e/v6e: 32 MiB; v7x with only 64 MiB physical VMEM: 16 MiB).
    return min(32 << 20, _vmem_capacity_bytes() // 4)


def _vmem_limit():
    # Explicit scoped-VMEM limit handed to Mosaic (v5e's default is only
    # 16 MiB); keeps plenty of headroom for Mosaic-internal scratch.
    return min(64 << 20, _vmem_capacity_bytes() // 2)


# ---------------------------------------------------------------------------
# In-kernel helpers
# ---------------------------------------------------------------------------

def _sigmoid_f32(x):
    # sigmoid(x) = 1 / (1 + exp(-x)): one EUP exp + approximate reciprocal
    # (avoids an exact divide; accuracy far below bf16 noise floor).
    return pl.reciprocal(1.0 + jnp.exp(-x), approx=True)


# ---------------------------------------------------------------------------
# Kernels
# ---------------------------------------------------------------------------

def _gram_tile_kernel(zi_ref, zj_ref, o_ref):
    """(tm, tn) tile of sigmoid(z @ z^T); per-tile column operand."""
    s = lax.dot_general(
        zi_ref[...], zj_ref[...],
        dimension_numbers=(((1,), (1,)), ((), ())),      # contract over D
        preferred_element_type=jnp.float32,
    )
    o_ref[...] = _sigmoid_f32(s).astype(o_ref.dtype)


def _gram_panel_kernel(zi_ref, zpanel_ref, o_ref, *, tn):
    """(tm, tn) tile of sigmoid(z @ z^T); column operand is the resident
    full (N, D) panel (DMA'd once per batch element), sliced in-kernel."""
    j = pl.program_id(2)
    col0 = pl.multiple_of(j * tn, 128)                   # tn is a 128-multiple
    zj = zpanel_ref[pl.ds(col0, tn), :]
    s = lax.dot_general(
        zi_ref[...], zj,
        dimension_numbers=(((1,), (1,)), ((), ())),
        preferred_element_type=jnp.float32,
    )
    o_ref[...] = _sigmoid_f32(s).astype(o_ref.dtype)


def _gram_kblock_kernel(zi_ref, zj_ref, o_ref, acc_ref):
    """K-blocked fallback for very large D: f32 accumulator, init/finalize."""
    @pl.when(pl.program_id(3) == 0)
    def _init():
        acc_ref[...] = jnp.zeros_like(acc_ref)

    acc_ref[...] += lax.dot_general(
        zi_ref[...], zj_ref[...],
        dimension_numbers=(((1,), (1,)), ((), ())),
        preferred_element_type=jnp.float32,
    )

    @pl.when(pl.program_id(3) == pl.num_programs(3) - 1)
    def _finalize():
        o_ref[...] = _sigmoid_f32(acc_ref[...]).astype(o_ref.dtype)


def _gram_batch_kernel(z_ref, adj_ref):
    """sigmoid(z @ z^T) for a chunk of bblk whole (small) graphs at once."""
    z = z_ref[...]
    s = lax.dot_general(
        z, z,
        dimension_numbers=(((2,), (2,)), ((0,), (0,))),  # batched, contract D
        preferred_element_type=jnp.float32,
    )
    adj_ref[...] = _sigmoid_f32(s).astype(adj_ref.dtype)


def _gram_batch_packed_kernel(z_ref, out_ref, *, n, bblk):
    """Small-graph chunk with the batch packed into the lane axis:
    out_ref is (N, bblk*N); column block b holds graph b's adjacency.
    Gives a >=128-lane output slab and a dense writeback DMA."""
    z = z_ref[...]
    s = lax.dot_general(
        z, z,
        dimension_numbers=(((2,), (2,)), ((0,), (0,))),
        preferred_element_type=jnp.float32,
    )
    adj = _sigmoid_f32(s).astype(out_ref.dtype)          # (bblk, n, n)
    for b in range(bblk):                                # static unroll
        out_ref[:, b * n:(b + 1) * n] = adj[b]


# ---------------------------------------------------------------------------
# Wrappers
# ---------------------------------------------------------------------------

def _pick_tile(N, D, in_isz, out_isz, panel, budget):
    """Largest 128-multiple tile dividing N whose double-buffered footprint
    fits the budget (None if even 128 does not fit -> K-blocked fallback)."""
    panel_foot = 2 * N * D * in_isz if panel else 0
    for t in range(min(N, 1024), 127, -128):
        if N % t:
            continue
        zi = t * D * in_isz
        zj = 0 if panel else t * D * in_isz
        foot = 2 * (zi + zj + t * t * out_isz) + panel_foot
        if foot <= budget:
            return t
    return None


def _decode_kblocked(z, out_dtype, dk=None):
    """Fallback for very large D: block the contraction dim, f32 accumulator."""
    B, N, D = z.shape
    in_isz = z.dtype.itemsize
    out_isz = jnp.dtype(out_dtype).itemsize
    budget = _vmem_budget()
    t = 256 if (N % 256 == 0) else 128                   # feed the 256^2 MXU when possible
    if dk is None:
        dk = 128
        while True:
            nxt = dk * 2
            foot = 2 * (2 * t * nxt * in_isz + t * t * out_isz) + t * t * 4
            if nxt < D and foot <= budget:
                dk = nxt
            else:
                break
    gk = pl.cdiv(D, dk)
    Dpad = gk * dk
    if Dpad != D:
        z = jnp.pad(z, ((0, 0), (0, 0), (0, Dpad - D)))  # zero-pad: safe for z@z^T
    gi = gj = N // t
    cost = pl.CostEstimate(
        flops=int(2 * B * N * N * Dpad),
        transcendentals=int(B * N * N),
        bytes_accessed=int(B * N * Dpad * in_isz * (1 + gi) + B * N * N * out_isz),
    )
    return pl.pallas_call(
        _gram_kblock_kernel,
        out_shape=jax.ShapeDtypeStruct((B, N, N), out_dtype),
        grid=(B, gi, gj, gk),
        in_specs=[
            pl.BlockSpec((pl.Squeezed(), t, dk), lambda b, i, j, k: (b, i, k)),
            pl.BlockSpec((pl.Squeezed(), t, dk), lambda b, i, j, k: (b, j, k)),
        ],
        out_specs=pl.BlockSpec((pl.Squeezed(), t, t), lambda b, i, j, k: (b, i, j)),
        scratch_shapes=[pltpu.VMEM((t, t), jnp.float32)],
        compiler_params=pltpu.CompilerParams(
            dimension_semantics=("parallel", "parallel", "parallel", "arbitrary"),
            vmem_limit_bytes=_vmem_limit()),
        cost_estimate=cost,
    )(z, z)


def _decode_tiled(z, out_dtype, max_tile=None):
    """Large graphs (N a multiple of 128): (B, N//t, N//t) grid of lane-dense
    output tiles; column operand kept resident as a full (N, D) panel."""
    B, N, D = z.shape
    in_isz = z.dtype.itemsize
    out_isz = jnp.dtype(out_dtype).itemsize
    budget = _vmem_budget()

    use_panel = (2 * N * D * in_isz) <= budget // 3
    t = _pick_tile(N, D, in_isz, out_isz, use_panel, budget)
    if t is None and use_panel:
        use_panel = False
        t = _pick_tile(N, D, in_isz, out_isz, False, budget)
    if t is None:                                        # D too large for full panels
        return _decode_kblocked(z, out_dtype)
    if max_tile is not None:
        t = min(t, max_tile)
    gi = gj = N // t

    zi_spec = pl.BlockSpec((pl.Squeezed(), t, D), lambda b, i, j: (b, i, 0))
    if use_panel:
        kernel = functools.partial(_gram_panel_kernel, tn=t)
        zj_spec = pl.BlockSpec((pl.Squeezed(), N, D), lambda b, i, j: (b, 0, 0))
        in_reads = 2 * B * N * D * in_isz                # rows once + panel once per b
    else:
        kernel = _gram_tile_kernel
        zj_spec = pl.BlockSpec((pl.Squeezed(), t, D), lambda b, i, j: (b, j, 0))
        in_reads = (1 + gi) * B * N * D * in_isz

    cost = pl.CostEstimate(
        flops=int(2 * B * N * N * D),
        transcendentals=int(B * N * N),
        bytes_accessed=int(in_reads + B * N * N * out_isz),
    )
    return pl.pallas_call(
        kernel,
        out_shape=jax.ShapeDtypeStruct((B, N, N), out_dtype),
        grid=(B, gi, gj),
        in_specs=[zi_spec, zj_spec],
        out_specs=pl.BlockSpec((pl.Squeezed(), t, t), lambda b, i, j: (b, i, j)),
        compiler_params=pltpu.CompilerParams(
            dimension_semantics=("parallel", "parallel", "parallel"),
            vmem_limit_bytes=_vmem_limit()),
        cost_estimate=cost,
    )(z, z)


def _decode_small(z, out_dtype):
    """Small graphs (N <= 128): whole batch chunks per grid step; lane-dense
    packed output layout when the chunk is wide enough."""
    B, N, D = z.shape
    in_isz = z.dtype.itemsize
    out_isz = jnp.dtype(out_dtype).itemsize
    budget = _vmem_budget()

    per_graph = N * D * in_isz + N * N * out_isz + N * N * 4   # + f32 gram intermediate
    bblk = max(1, min(B, budget // (4 * per_graph)))
    if B >= 2:
        bblk = min(bblk, pl.cdiv(B, 2))      # >= 2 grid steps so dual-TC chips get work
    steps = pl.cdiv(B, bblk)
    Bpad = steps * bblk
    if Bpad != B:                            # pad batch instead of divisor search
        z = jnp.pad(z, ((0, Bpad - B), (0, 0), (0, 0)))

    pack = (1 < bblk <= 64) and (N % 8 == 0) and (N < 128) and (bblk * N >= 128)

    cost = pl.CostEstimate(
        flops=int(2 * Bpad * N * N * D),
        transcendentals=int(Bpad * N * N),
        bytes_accessed=int(Bpad * (N * D * in_isz + N * N * out_isz)),
    )
    cparams = pltpu.CompilerParams(dimension_semantics=("parallel",),
                                   vmem_limit_bytes=_vmem_limit())
    in_spec = pl.BlockSpec((bblk, N, D), lambda s: (s, 0, 0))

    if pack:
        out = pl.pallas_call(
            functools.partial(_gram_batch_packed_kernel, n=N, bblk=bblk),
            out_shape=jax.ShapeDtypeStruct((steps, N, bblk * N), out_dtype),
            grid=(steps,),
            in_specs=[in_spec],
            out_specs=pl.BlockSpec((pl.Squeezed(), N, bblk * N), lambda s: (s, 0, 0)),
            compiler_params=cparams,
            cost_estimate=cost,
        )(z)
        # Undo the lane packing (layout plumbing in plain XLA).
        out = out.reshape(steps, N, bblk, N).transpose(0, 2, 1, 3).reshape(Bpad, N, N)
    else:
        out = pl.pallas_call(
            _gram_batch_kernel,
            out_shape=jax.ShapeDtypeStruct((Bpad, N, N), out_dtype),
            grid=(steps,),
            in_specs=[in_spec],
            out_specs=pl.BlockSpec((bblk, N, N), lambda s: (s, 0, 0)),
            compiler_params=cparams,
            cost_estimate=cost,
        )(z)
    return out[:B] if Bpad != B else out


def inner_product_decoder(z, dropout: float = 0.0, training: bool = False,
                          rng=None, out_dtype=None,
                          compute_dtype=jnp.bfloat16):
    """adj = sigmoid(dropout(z) @ dropout(z)^T) per batch.  (B,N,D)->(B,N,N).

    compute_dtype: MXU operand dtype (default bf16 = native MXU rate + half
                   the input DMA; accumulation is always f32).  Pass None to
                   keep z's own dtype (exact f32 operands).
    out_dtype:     defaults to z.dtype; pass jnp.bfloat16 to halve the HBM
                   writeback in the memory-bound (small D) regime.
    """
    B, N, D = z.shape
    out_dtype = jnp.dtype(out_dtype) if out_dtype is not None else z.dtype

    if training and dropout > 0.0:
        # Training-mode F.dropout: Bernoulli keep-mask + 1/(1-p) rescale.
        # TODO(synk): fuse into the kernels with pltpu.prng_seed/prng_random_bits
        #             (seeded per (batch, row-block)) to skip this extra pass.
        if rng is None:
            raise ValueError("training=True with dropout>0 requires `rng`.")
        keep = jax.random.bernoulli(rng, 1.0 - dropout, z.shape)
        z = jnp.where(keep, z / (1.0 - dropout), 0.0).astype(z.dtype)

    if compute_dtype is not None:
        z = z.astype(compute_dtype)

    if N <= 128:
        return _decode_small(z, out_dtype)
    if N % 128 == 0:
        return _decode_tiled(z, out_dtype)
    # Ragged large N: pad rows to a lane multiple, tile, then crop.
    # TODO(synk): mask boundary tiles in-kernel instead of pad+crop.
    n_pad = (-N) % 128
    zp = jnp.pad(z, ((0, 0), (0, n_pad), (0, 0)))
    return _decode_tiled(zp, out_dtype)[:, :N, :N]


# ---------------------------------------------------------------------------
# Self-test
# ---------------------------------------------------------------------------

if __name__ == "__main__":
    def ref_decode(zz):
        return jax.nn.sigmoid(jnp.einsum("bnd,bmd->bnm", zz, zz))

    # 1) Small-graph path (typical OrphicX shapes), default bf16 compute.
    B, N, D = 2, 16, 32
    z1 = jax.random.normal(jax.random.PRNGKey(0), (B, N, D), dtype=jnp.float32)
    adj1 = jax.block_until_ready(
        inner_product_decoder(z1, dropout=0.5, training=False))
    assert adj1.shape == (B, N, N) and adj1.dtype == jnp.float32
    assert jnp.allclose(adj1, ref_decode(z1), atol=5e-2)

    # 2) Same input with exact f32 operands.
    adj1f = jax.block_until_ready(inner_product_decoder(z1, compute_dtype=None))
    assert jnp.allclose(adj1f, ref_decode(z1), atol=1e-2)

    # 3) Lane-packed small path (batch chunk packed into the lane axis).
    z3 = jax.random.normal(jax.random.PRNGKey(1), (16, 16, 8), dtype=jnp.float32)
    adj3 = jax.block_until_ready(inner_product_decoder(z3))
    assert adj3.shape == (16, 16, 16)
    assert jnp.allclose(adj3, ref_decode(z3), atol=5e-2)

    # 4) Tiled path with the resident (N, D) column panel, N=384 -> 384-wide tile.
    z4 = jax.random.normal(jax.random.PRNGKey(2), (2, 384, 64), dtype=jnp.float32)
    adj4 = jax.block_until_ready(inner_product_decoder(z4))
    assert adj4.shape == (2, 384, 384)
    assert jnp.allclose(adj4, ref_decode(z4), atol=5e-2)

    # 5) Tiled path with several column tiles (exercises in-kernel panel slicing).
    z5 = jax.random.normal(jax.random.PRNGKey(3), (1, 256, 64), dtype=jnp.float32)
    adj5 = jax.block_until_ready(
        _decode_tiled(z5.astype(jnp.bfloat16), jnp.float32, max_tile=128))
    assert jnp.allclose(adj5, ref_decode(z5), atol=5e-2)

    # 6) Huge-D fallback: K-blocked accumulation (forced dk + ragged-D padding).
    z6 = jax.random.normal(jax.random.PRNGKey(4), (1, 256, 192), dtype=jnp.float32)
    adj6 = jax.block_until_ready(
        _decode_kblocked(z6.astype(jnp.bfloat16), jnp.float32, dk=128))
    assert jnp.allclose(adj6, ref_decode(z6), atol=5e-2)

    print("KERNEL_OK")
</pallas_src>

<mosaic_0001>
module attributes {stable_mosaic.version = 11 : i64} {
  func.func @_gram_batch_kernel(%arg0: i32, %arg1: memref<1x16x32xbf16, #tpu.memory_space<vmem>>, %arg2: memref<1x16x16xf32, #tpu.memory_space<vmem>>) attributes {dimension_semantics = [#tpu.dimension_semantics<parallel>], iteration_bounds = array<i64: 2>, scalar_prefetch = 0 : i64, scratch_operands = 0 : i64, tpu.core_type = #tpu.core_type<tc>, window_params = [{transform_indices = @transform_0, window_bounds = array<i64: 1, 16, 32>}, {transform_indices = @transform_1, window_bounds = array<i64: 1, 16, 16>}]} {
    %c0 = arith.constant 0 : index
    %c0_0 = arith.constant 0 : index
    %c0_1 = arith.constant 0 : index
    %0 = vector.load %arg1[%c0, %c0_0, %c0_1] : memref<1x16x32xbf16, #tpu.memory_space<vmem>>, vector<1x16x32xbf16>
    %cst = arith.constant dense<0.000000e+00> : vector<1x16x16xf32>
    %1 = tpu.matmul %0, %0, %cst {dimension_numbers = #tpu.dot_dimension_numbers<[2], [2], [1], [1], [0, 0, 0, 1, 1, 1], [0], [0]>} : vector<1x16x32xbf16>, vector<1x16x32xbf16>, vector<1x16x16xf32> -> vector<1x16x16xf32>
    %cst_2 = arith.constant 0.000000e+00 : f32
    %2 = vector.broadcast %cst_2 : f32 to vector<1x16x16xf32>
    %3 = arith.subf %2, %1 : vector<1x16x16xf32>
    %4 = math.exp %3 : vector<1x16x16xf32>
    %cst_3 = arith.constant 1.000000e+00 : f32
    %5 = vector.broadcast %cst_3 : f32 to vector<1x16x16xf32>
    %6 = arith.addf %5, %4 : vector<1x16x16xf32>
    %7 = tpu.reciprocal %6 {approx = true} : vector<1x16x16xf32> -> vector<1x16x16xf32>
    %c0_4 = arith.constant 0 : index
    %c0_5 = arith.constant 0 : index
    %c0_6 = arith.constant 0 : index
    %8 = vector.load %arg2[%c0_4, %c0_5, %c0_6] : memref<1x16x16xf32, #tpu.memory_space<vmem>>, vector<1x16x16xf32>
    tpu.vector_store %arg2[%c0_4, %c0_5, %c0_6], %7 {strides = array<i32>} : memref<1x16x16xf32, #tpu.memory_space<vmem>>, vector<1x16x16xf32>,
    return
  }
  func.func @transform_0(%arg0: i32) -> (i32, i32, i32) {
    %c0_i32 = arith.constant 0 : i32
    %c0_i32_0 = arith.constant 0 : i32
    %c0_i32_1 = arith.constant 0 : i32
    return %arg0, %c0_i32, %c0_i32_0 : i32, i32, i32
  }
  func.func @transform_1(%arg0: i32) -> (i32, i32, i32) {
    %c0_i32 = arith.constant 0 : i32
    %c0_i32_0 = arith.constant 0 : i32
    %c0_i32_1 = arith.constant 0 : i32
    return %arg0, %c0_i32, %c0_i32_0 : i32, i32, i32
  }
}

</mosaic_0001>

<llo_original>
// kernel: tpu_custom_call.1
$region0: #{tpu_custom_call.1}
  #allocation0 [shape = 'u32[]', space=smem, size = 0x4, offset = 0x4, fixed_abs, tag = 'smem constant byte address 0x4 - core index']
  #allocation1 [shape = 'u32[144,128]{1,0:T(1,128)}', space=vmem, size = 0x12000, scoped, tag = 'internal scratch']
  %s0 = inlined_call_operand.hbm [shape: bf16[2,16,32], index: 0, kind: input, shape index: {}]
  %s1 = inlined_call_operand.hbm [shape: f32[2,16,16], index: 1, kind: output, shape index: {}]
  %s2 = sld [smem:[#allocation0]]
  $region41: #{tpu_custom_call.1} parent=0
    _
  %s4 = ssub.s32 1, %s2
  %s5 = scalar_select 0, %s4, %s2
  $region1: #{tpu_custom_call.1} parent=0
    #allocation2 [shape = 'u8[8192]{0}', space=vmem, size = 0x2000, scoped, tag = 'input window, operand 0']
    #allocation3 [shape = 's32[2]{0}', space=sflag, size = 0x8, scoped, tag = 'scoped memory for tpu_custom_call.1']
    #allocation4 [shape = 's32[2]{0}', space=sflag, size = 0x8, scoped, tag = 'scoped memory for tpu_custom_call.1']
    #allocation5 [shape = 'u8[16384]{0}', space=vmem, size = 0x4000, scoped, tag = 'output window, operand 0']
    %6 = vsyncpa [#allocation3], 0
    %s7 = scalar_lea.sflag [#allocation3], 1
    %8 = vsyncpa %s7, 0
    %9 = vsyncpa [#allocation4], 0
    %s10 = scalar_lea.sflag [#allocation4], 1
    %11 = vsyncpa %s10, 0
    loop: start=0, step=1, limit=4
    $region2: #{tpu_custom_call.1} parent=1 // loop_pre_header
      _
    $region3: #{tpu_custom_call.1} parent=1 // loop_header
      %s13 = sphi 0, %s17
      %p14 = scmp.ge.s32.totalorder %s13, 4
      %s23 = sphi 0, %s25
      %s26 = sphi 0, %s23
      %s27 = sphi 0, %s26
      %s43 = sphi 0, %s27
      %s49 = sphi 0, %s51
      %s52 = sphi 0, %s49
      %s53 = sphi 0, %s52
      %s69 = sphi 0, %s53
    $region4: #{tpu_custom_call.1} parent=1 // loop_header_branch
      %16 = sbr.rel (%p14) target = $region8
    $region5: #{tpu_custom_call.1} parent=1 // loop_body
      %s18 = ssub.s32 %s13, 1
      %s19 = ssub.s32 %s13, 2
      %s20 = sadd.s32 %s13, 1
      %s21 = ssub.s32 %s13, %s20
      %p22 = scmp.eq.s32.totalorder %s21, 0
      %s24 = sadd.s32 %s23, 1
      %s25 = scalar_select %p22, %s23, %s24
      %p28 = pneg %p22
      %p29 = scmp.eq.s32.totalorder %s13, 1
      %p30 = por %p28, %p29
      %p31 = scmp.ne.s32.totalorder %s23, %s26
      %p32 = scmp.eq.s32.totalorder %s13, 0
      %p33 = por %p31, %p32
      %p34 = scmp.ne.s32.totalorder %s23, %s26
      %p35 = scmp.eq.s32.totalorder %s18, 1
      %p36 = por %p34, %p35
      %p37 = scmp.ne.s32.totalorder %s26, %s27
      %p38 = scmp.eq.s32.totalorder %s18, 0
      %p39 = por %p37, %p38
      %p40 = scmp.ne.s32.totalorder %s26, %s27
      %p41 = scmp.eq.s32.totalorder %s19, 1
      %p42 = por %p40, %p41
      %p44 = scmp.ne.s32.totalorder %s27, %s43
      %p45 = scmp.eq.s32.totalorder %s19, 0
      %p46 = por %p44, %p45
      %s47 = ssub.s32 %s13, %s20
      %p48 = scmp.eq.s32.totalorder %s47, 0
      %s50 = sadd.s32 %s49, 1
      %s51 = scalar_select %p48, %s49, %s50
      %p54 = pneg %p48
      %p55 = scmp.eq.s32.totalorder %s13, 1
      %p56 = por %p54, %p55
      %p57 = scmp.ne.s32.totalorder %s49, %s52
      %p58 = scmp.eq.s32.totalorder %s13, 0
      %p59 = por %p57, %p58
      %p60 = scmp.ne.s32.totalorder %s49, %s52
      %p61 = scmp.eq.s32.totalorder %s18, 1
      %p62 = por %p60, %p61
      %p63 = scmp.ne.s32.totalorder %s52, %s53
      %p64 = scmp.eq.s32.totalorder %s18, 0
      %p65 = por %p63, %p64
      %p66 = scmp.ne.s32.totalorder %s52, %s53
      %p67 = scmp.eq.s32.totalorder %s19, 1
      %p68 = por %p66, %p67
      %p70 = scmp.ne.s32.totalorder %s53, %s69
      %p71 = scmp.eq.s32.totalorder %s19, 0
      %p72 = por %p70, %p71
      %p73 = scmp.le.s32.totalorder 1, %s13
      %p74 = scmp.lt.s32.totalorder %s13, 3
      %p75 = pnand %p73, %p74
      %p76 = pneg %p75
      // Predicated region
      $region9: #{tpu_custom_call.1} parent=5 // pred_check
        _
      $region10: #{tpu_custom_call.1} parent=5 // pred_check_branch
        %78 = sbr.rel (%p75) target = $region12
      $region11: #{tpu_custom_call.1} parent=5 // pred_region
        %s79 = ssub.s32 %s13, 1
      $region12: #{tpu_custom_call.1} parent=5 // pred_fallthru
        _
      %p80 = scmp.lt.s32.totalorder %s13, 2
      // Predicated region
      $region13: #{tpu_custom_call.1} parent=5 // pred_check
        %p81 = pneg %p80
      $region14: #{tpu_custom_call.1} parent=5 // pred_check_branch
        %83 = sbr.rel (%p81) target = $region16
      $region15: #{tpu_custom_call.1} parent=5 // pred_region
        // Predicated region
        $region17: #{tpu_custom_call.1} parent=15 // pred_check
          %p84 = pneg %p33
        $region18: #{tpu_custom_call.1} parent=15 // pred_check_branch
          %86 = sbr.rel (%p84) target = $region20
        $region19: #{tpu_custom_call.1} parent=15 // pred_region
          %s87 = sand.u32 %s23, 1
          %s88 = scalar_lea.sflag [#allocation3], %s87
          %s89 = sand.u32 %s23, 1
          %s90 = smul.addr %s89, 8
          %s91 = scalar_lea.vmem [#allocation2], %s90
          %s93 = ssub.s32 128, 128
          %94 = vsyncadd %s88, %s93
          %s95 = smul.addr %s13, 2
          %s96 = smul.addr %s95, 64
          %s97 = scalar_lea.hbm %s0, %s96
          %s98 = sshll.u32 %s91, 4
          %s99 = int_to_ptr.vmem [resolvable:$true] %s98
          %104 = dma.hbm_to_vmem [thread:$0]  %s97, 128, %s99, %s88, 64, 64, 4
        $region20: #{tpu_custom_call.1} parent=15 // pred_fallthru
          _
      $region16: #{tpu_custom_call.1} parent=5 // pred_fallthru
        _
      %p105 = scmp.le.s32.totalorder 1, %s13
      %p106 = scmp.lt.s32.totalorder %s13, 3
      %p107 = pnand %p105, %p106
      %p108 = pneg %p107
      // Predicated region
      $region21: #{tpu_custom_call.1} parent=5 // pred_check
        _
      $region22: #{tpu_custom_call.1} parent=5 // pred_check_branch
        %110 = sbr.rel (%p107) target = $region24
      $region23: #{tpu_custom_call.1} parent=5 // pred_region
        %s111 = ssub.s32 %s13, 1
        %s112 = sand.u32 %s26, 1
        %s113 = scalar_lea.sflag [#allocation3], %s112
        %s114 = sand.u32 %s26, 1
        %s115 = smul.addr %s114, 8
        %s116 = scalar_lea.vmem [#allocation2], %s115
        // Predicated region
        $region25: #{tpu_custom_call.1} parent=23 // pred_check
          %p117 = pneg %p39
        $region26: #{tpu_custom_call.1} parent=23 // pred_check_branch
          %119 = sbr.rel (%p117) target = $region28
        $region27: #{tpu_custom_call.1} parent=23 // pred_region
          %120 = dma.done %s113, 128
        $region28: #{tpu_custom_call.1} parent=23 // pred_fallthru
          _
        %s121 = sand.u32 %s26, 1
        %s122 = scalar_lea.sflag [#allocation3], %s121
        %s123 = sand.u32 %s26, 1
        %s124 = smul.addr %s123, 8
        %s125 = scalar_lea.vmem [#allocation2], %s124
        %p126 = pneg %p39
        %p127 = pneg %p36
        %p128 = pneg %p65
        %p129 = pneg %p62
        %s130 = sand.u32 %s52, 1
        %s131 = scalar_lea.sflag [#allocation4], %s130
        %s132 = sand.u32 %s52, 1
        %s133 = smul.addr %s132, 16
        %s134 = scalar_lea.vmem [#allocation5], %s133
        %v136 = vld [vmem:[%s116] sm:$0xf]
        %v137 = vld [vmem:[%s116 + $0x4] sm:$0xf]
        %v140 = vunpack.c.l.b16 %v136
        %v141 = vunpack.c.l.b16 %v137
        %v142 = vpack.c.b16 %v141, %v140
        %vm143 = vcmask 261120
        %v145 = vsel %vm143, %v142, 0
        %147 = vmatprep.subr.bf16.mxu0 0
        %148 = vmatpush1.bf16.xpose.msra.mxu0 0
        %149 = vmatprep.subr.bf16.mxu0 0
        %150 = vmatpush1.bf16.xpose.msra.mxu0 0
        %151 = vmatprep.subr.bf16.mxu0 0
        %152 = vmatpush1.bf16.xpose.msra.mxu0 0
        %153 = vmatprep.subr.bf16.mxu0 0
        %154 = vmatpush1.bf16.xpose.msra.mxu0 0
        %155 = vmatprep.subr.bf16.mxu0 0
        %156 = vmatpush1.bf16.xpose.msra.mxu0 0
        %157 = vmatprep.subr.bf16.mxu0 0
        %158 = vmatpush1.bf16.xpose.msra.mxu0 0
        %159 = vmatprep.subr.bf16.mxu0 0
        %160 = vmatpush1.bf16.xpose.msra.mxu0 0
        %161 = vmatprep.subr.bf16.mxu0 0
        %162 = vmatpush1.bf16.xpose.msra.mxu0 %v145
        %163 = vmatprep.subr.bf16.mxu0 0
        %164 = vmatpush2.bf16.xpose.msra.mxu0 0
        %165 = vmatprep.subr.bf16.mxu0 0
        %166 = vmatpush2.bf16.xpose.msra.mxu0 0
        %167 = vmatprep.subr.bf16.mxu0 0
        %168 = vmatpush2.bf16.xpose.msra.mxu0 0
        %169 = vmatprep.subr.bf16.mxu0 0
        %170 = vmatpush2.bf16.xpose.msra.mxu0 0
        %171 = vmatprep.subr.bf16.mxu0 0
        %172 = vmatpush2.bf16.xpose.msra.mxu0 0
        %173 = vmatprep.subr.bf16.mxu0 0
        %174 = vmatpush2.bf16.xpose.msra.mxu0 0
        %175 = vmatprep.subr.bf16.mxu0 0
        %176 = vmatpush2.bf16.xpose.msra.mxu0 0
        %177 = vmatprep.subr.bf16.mxu0 0
        %178 = vmatpush2.bf16.xpose.msra.mxu0 0
        %179 = vmatprep.mubr.bf16.mxu0 0
        %180 = vmatmul.mubr.bf16.gmra.mxu0 %v145
        %v181 = vpop.f32.mrf.mxu0
        %v182 = vadd.f32 0.0, %v181
        %v183 = vpop.f32.mrf.mxu0
        %v184 = vpop.f32.mrf.mxu0
        %v185 = vadd.f32 0.0, %v184
        %v186 = vpop.f32.mrf.mxu0
        %187 = vdwg.mxu0
        %v188 = vsub.f32 0.0, %v182
        %v189 = vsub.f32 0.0, %v185
        %v190 = vmul.f32 %v188, 1.442695
        %v191 = vpow.pop %v190
        %v192 = vmul.f32 %v189, 1.442695
        %v193 = vpow.pop %v192
        %v194 = vadd.f32 %v191, 1.0
        %v195 = vadd.f32 %v193, 1.0
        %v196 = vrcp.pop %v194
        %v197 = vrcp.pop %v195
        %vm198 = vcmask 130048
        %199 = vst.msk [vmem:[%s134] sm:$0xff] %vm198, %v196
        %200 = vst.msk [vmem:[%s134 + $0x8] sm:$0xff] %vm198, %v197
        %s201 = sand.u32 %s52, 1
        %s202 = scalar_lea.sflag [#allocation4], %s201
        %s203 = sand.u32 %s52, 1
        %s204 = smul.addr %s203, 16
        %s205 = scalar_lea.vmem [#allocation5], %s204
        // Predicated region
        $region29: #{tpu_custom_call.1} parent=23 // pred_check
          %p206 = pneg %p62
        $region30: #{tpu_custom_call.1} parent=23 // pred_check_branch
          %208 = sbr.rel (%p206) target = $region32
        $region31: #{tpu_custom_call.1} parent=23 // pred_region
          %s210 = ssub.s32 256, 256
          %211 = vsyncadd %s202, %s210
          %s212 = smul.addr %s18, 2
          %s213 = smul.addr %s212, 128
          %s214 = scalar_lea.hbm %s1, %s213
          %s215 = sshll.u32 %s205, 4
          %s216 = int_to_ptr.vmem [resolvable:$true] %s215
          %221 = dma.vmem_to_hbm [thread:$0]  %s216, 256, %s214, %s202, 128, 128, 8
        $region32: #{tpu_custom_call.1} parent=23 // pred_fallthru
          _
      $region24: #{tpu_custom_call.1} parent=5 // pred_fallthru
        _
      %p222 = scmp.le.s32.totalorder 2, %s13
      // Predicated region
      $region33: #{tpu_custom_call.1} parent=5 // pred_check
        %p223 = pneg %p222
      $region34: #{tpu_custom_call.1} parent=5 // pred_check_branch
        %225 = sbr.rel (%p223) target = $region36
      $region35: #{tpu_custom_call.1} parent=5 // pred_region
        %s226 = ssub.s32 %s13, 2
        // Predicated region
        $region37: #{tpu_custom_call.1} parent=35 // pred_check
          %p227 = pneg %p68
        $region38: #{tpu_custom_call.1} parent=35 // pred_check_branch
          %229 = sbr.rel (%p227) target = $region40
        $region39: #{tpu_custom_call.1} parent=35 // pred_region
          %s230 = sand.u32 %s53, 1
          %s231 = scalar_lea.sflag [#allocation4], %s230
          %s232 = sand.u32 %s53, 1
          %s233 = smul.addr %s232, 16
          %s234 = scalar_lea.vmem [#allocation5], %s233
          %235 = dma.done %s231, 256
        $region40: #{tpu_custom_call.1} parent=35 // pred_fallthru
          _
      $region36: #{tpu_custom_call.1} parent=5 // pred_fallthru
        _
    $region6: #{tpu_custom_call.1} parent=1 // loop_footer
      %s17 = sadd.s32 1, %s13
    $region7: #{tpu_custom_call.1} parent=1 // loop_footer_branch
      %12 = sbr.rel target = $region3
    $region8: #{tpu_custom_call.1} parent=1 // loop_exit
      _
    %236 = vsyncpa [#allocation3], 1
    %s237 = scalar_lea.sflag [#allocation3], 1
    %238 = vsyncpa %s237, 1
    %239 = vsyncpa [#allocation4], 1
    %s240 = scalar_lea.sflag [#allocation4], 1
    %241 = vsyncpa %s240, 1

</llo_original>
